<compile_context>
chip_gen: v7x
topology: tpu7x:2x2x1
jax: 0.10.0
libtpu: 0.0.40
codegen_flags: <defaults>
</compile_context>

<pallas_src>
import functools

import jax
import jax.numpy as jnp
from jax.experimental import pallas as pl
from jax.experimental.pallas import tpu as pltpu


def _dice_sums_kernel(x_ref, tgt_ref, inter_ref, zsum_ref, ysum_ref, *,
                      do_softmax, needs_mask, hw_valid, tiles_per_core):
    # x_ref:     (B, C, T)        VMEM prediction tile (any float dtype)
    # tgt_ref:   (B, T)           VMEM int8/int32 class labels
    # inter_ref: (1, C, 128)      lane-parallel accumulated sum(p * onehot)
    # zsum_ref:  (1, C, 128)      lane-parallel accumulated sum(p * p)
    # ysum_ref:  (1, C, 128)      lane-parallel accumulated sum(onehot)
    t = pl.program_id(1)

    @pl.when(t == 0)
    def _init():
        inter_ref[...] = jnp.zeros_like(inter_ref)
        zsum_ref[...] = jnp.zeros_like(zsum_ref)
        ysum_ref[...] = jnp.zeros_like(ysum_ref)

    x = x_ref[...].astype(jnp.float32)                       # (B, C, T)
    B, C, T = x.shape

    if do_softmax:
        m = jnp.max(x, axis=1, keepdims=True)                # (B, 1, T)
        e = jnp.exp(x - m)
        s = jnp.sum(e, axis=1, keepdims=True)
        # Exact divide kept on purpose: pl.reciprocal(approx=True) shifts the
        # result by ~1e-3 relative and would break the 1e-5 tolerance vs torch.
        p = e / s
    else:
        p = x

    tgt = tgt_ref[...].astype(jnp.int32)                     # (B, T)
    cls = jax.lax.broadcasted_iota(jnp.int32, (B, C, T), 1)  # class ids along axis 1
    match = tgt[:, None, :] == cls                            # (B, C, T) bool

    if needs_mask:
        blk = pl.program_id(0) * tiles_per_core + t
        lane = jax.lax.broadcasted_iota(jnp.int32, (1, 1, T), 2)
        valid = (blk * T + lane) < hw_valid                   # (1, 1, T)
        p = jnp.where(valid, p, jnp.float32(0.0))
        match = jnp.logical_and(match, valid)

    one = jnp.float32(1.0)
    zero = jnp.float32(0.0)
    inter_e = jnp.where(match, p, zero)                       # (B, C, T)
    ysum_e = jnp.where(match, one, zero)                      # (B, C, T)
    zsum_e = p * p                                            # (B, C, T)

    # Fold the batch axis (pure VALU vreg adds).
    inter_c = jnp.sum(inter_e, axis=0, keepdims=True)         # (1, C, T)
    ysum_c = jnp.sum(ysum_e, axis=0, keepdims=True)
    zsum_c = jnp.sum(zsum_e, axis=0, keepdims=True)

    # Fold the spatial lanes down to 128 with static 128-aligned slices + adds:
    # no cross-lane (XLU) work per grid step; final lane reduce happens in JAX.
    n_chunks = T // 128

    def fold(v):
        acc = v[:, :, 0:128]
        for j in range(1, n_chunks):
            acc = acc + v[:, :, j * 128:(j + 1) * 128]
        return acc

    inter_ref[...] += fold(inter_c)
    zsum_ref[...] += fold(zsum_c)
    ysum_ref[...] += fold(ysum_c)


def _round_up(x, m):
    return (x + m - 1) // m * m


def _vmem_capacity_bytes():
    try:
        return int(pltpu.get_tpu_info().vmem_capacity_bytes)
    except Exception:
        return 64 << 20  # conservative fallback (v7x per-TensorCore)


def _pick_spatial_tile(hw_core, b, c_pad, elem_bytes, bytes_budget):
    """Largest 128-multiple tile dividing hw_core that (a) keeps one prediction
    block under bytes_budget (sublane-padded C accounted for) and (b) leaves at
    least 2 grid steps per core when the image is big enough."""
    cap = max(128, (bytes_budget // max(1, b * c_pad * elem_bytes)) // 128 * 128)
    min_steps_cap = max(128, (hw_core // 2) // 128 * 128)
    t = min(hw_core, cap, min_steps_cap)
    while hw_core % t != 0:
        t -= 128
    return t


def dice_loss(inputs, target, n_classes, weight=None, softmax=False):
    """Pallas implementation of DiceLoss.forward (returns scalar f32 loss)."""
    B, C, H, W = inputs.shape
    assert C == n_classes
    HW = H * W

    elem = jnp.dtype(inputs.dtype).itemsize
    sub_mult = max(8, 32 // elem)                 # sublane multiple: 8 f32 / 16 bf16
    c_pad = _round_up(C, sub_mult)

    # Generation-aware budgets: 128 MiB physical VMEM (v5e/v6e) vs 64 MiB (v7x).
    vmem_total = _vmem_capacity_bytes()
    if vmem_total >= (100 << 20):
        pred_block_budget, vmem_cap = 16 << 20, 96 << 20
    else:
        pred_block_budget, vmem_cap = 8 << 20, 48 << 20

    # Pad the spatial extent to 128-aligned tiles; use a 2-way "parallel" grid
    # axis so spatial work shards over v7x's two TensorCores (harmless serial
    # outer loop on single-core v5e/v6e).
    hw_128 = _round_up(HW, 128)
    n_cores = 2 if hw_128 >= 256 else 1
    hw_pad = _round_up(HW, 128 * n_cores)
    hw_core = hw_pad // n_cores

    tile = _pick_spatial_tile(hw_core, B, c_pad, elem, pred_block_budget)
    tiles_per_core = hw_core // tile
    needs_mask = hw_pad != HW

    x = inputs.reshape(B, C, HW)                  # free reshape, NCHW-contiguous
    lbl_dtype = jnp.int8 if n_classes <= 127 else jnp.int32
    tgt = target.reshape(B, HW).astype(lbl_dtype)
    if needs_mask:
        x = jnp.pad(x, ((0, 0), (0, 0), (0, hw_pad - HW)))
        tgt = jnp.pad(tgt, ((0, 0), (0, hw_pad - HW)))

    # VMEM accounting with sublane padding (double-buffered inputs + outputs).
    lbl_elem = jnp.dtype(lbl_dtype).itemsize
    b_lbl_pad = _round_up(B, max(8, 32 // lbl_elem))
    vmem_need = (2 * (B * c_pad * tile * elem + b_lbl_pad * tile * lbl_elem)
                 + 2 * 3 * c_pad * 128 * 4 + (2 << 20))
    vmem_limit = int(min(max(vmem_need, 32 << 20), vmem_cap))

    bytes_accessed = (B * C * hw_pad * elem + B * hw_pad * lbl_elem
                      + 3 * n_cores * C * 128 * 4)
    flops = B * C * hw_pad * (6 if softmax else 4)
    transcendentals = B * C * hw_pad if softmax else 0

    kernel = functools.partial(
        _dice_sums_kernel,
        do_softmax=bool(softmax),
        needs_mask=needs_mask,
        hw_valid=HW,
        tiles_per_core=tiles_per_core,
    )

    inter_p, zsum_p, ysum_p = pl.pallas_call(
        kernel,
        out_shape=(
            jax.ShapeDtypeStruct((n_cores, C, 128), jnp.float32),
            jax.ShapeDtypeStruct((n_cores, C, 128), jnp.float32),
            jax.ShapeDtypeStruct((n_cores, C, 128), jnp.float32),
        ),
        grid_spec=pltpu.PrefetchScalarGridSpec(
            num_scalar_prefetch=0,
            grid=(n_cores, tiles_per_core),
            in_specs=[
                pl.BlockSpec((B, C, tile),
                             lambda p, t: (0, 0, p * tiles_per_core + t)),
                pl.BlockSpec((B, tile),
                             lambda p, t: (0, p * tiles_per_core + t)),
            ],
            out_specs=[
                pl.BlockSpec((1, C, 128), lambda p, t: (p, 0, 0)),
                pl.BlockSpec((1, C, 128), lambda p, t: (p, 0, 0)),
                pl.BlockSpec((1, C, 128), lambda p, t: (p, 0, 0)),
            ],
        ),
        compiler_params=pltpu.CompilerParams(
            dimension_semantics=("parallel", "arbitrary"),
            vmem_limit_bytes=vmem_limit,
        ),
        cost_estimate=pl.CostEstimate(
            flops=flops, transcendentals=transcendentals,
            bytes_accessed=bytes_accessed,
        ),
    )(x, tgt)

    if weight is None:
        weight = [1.0] * n_classes
    w = jnp.asarray(weight, dtype=jnp.float32)

    # Tiny O(n_cores * C * 128) finalization in plain JAX.
    smooth = jnp.float32(1e-5)
    inter = jnp.sum(inter_p, axis=(0, 2))          # (C,)
    zsum = jnp.sum(zsum_p, axis=(0, 2))
    ysum = jnp.sum(ysum_p, axis=(0, 2))
    dice = jnp.float32(1.0) - (2.0 * inter + smooth) / (zsum + ysum + smooth)
    # TODO(synk): class_wise_dice list with .item() is host-side logging only; not part of the returned loss.
    return jnp.sum(dice * w) / jnp.float32(n_classes)


def _dice_loss_ref(inputs, target, n_classes, weight=None, softmax=False):
    """Pure-JAX reference mirroring the PyTorch module."""
    if softmax:
        inputs = jax.nn.softmax(inputs, axis=1)
    if weight is None:
        weight = [1.0] * n_classes
    target = target.astype(jnp.float32)
    smooth = 1e-5
    loss = jnp.float32(0.0)
    for i in range(n_classes):
        score = inputs[:, i].astype(jnp.float32)
        tgt = (target == i).astype(jnp.float32)
        intersect = jnp.sum(score * tgt)
        y_sum = jnp.sum(tgt * tgt)
        z_sum = jnp.sum(score * score)
        dice = 1.0 - (2 * intersect + smooth) / (z_sum + y_sum + smooth)
        loss = loss + dice * weight[i]
    return loss / n_classes


if __name__ == "__main__":
    B, C, H, W = 2, 4, 16, 16
    key = jax.random.PRNGKey(0)
    k_in, k_tg, k_in2, k_tg2 = jax.random.split(key, 4)

    inputs = jax.random.normal(k_in, (B, C, H, W), dtype=jnp.float32)
    target = jax.random.randint(k_tg, (B, H, W), 0, C, dtype=jnp.int32)

    # Case 1: raw logits + fused in-kernel softmax (typical training call).
    loss = jax.block_until_ready(dice_loss(inputs, target, n_classes=C, softmax=True))
    ref = _dice_loss_ref(inputs, target, n_classes=C, softmax=True)
    assert jnp.allclose(loss, ref, rtol=1e-5, atol=1e-5), (loss, ref)

    # Case 2: probabilities already given + non-uniform class weights.
    probs = jax.nn.softmax(inputs, axis=1)
    wts = [0.5, 1.0, 2.0, 1.5]
    loss2 = jax.block_until_ready(
        dice_loss(probs, target, n_classes=C, weight=wts, softmax=False))
    ref2 = _dice_loss_ref(probs, target, n_classes=C, weight=wts, softmax=False)
    assert jnp.allclose(loss2, ref2, rtol=1e-5, atol=1e-5), (loss2, ref2)

    # Case 3: non-128-divisible spatial extent exercises pad + in-kernel mask.
    H3 = W3 = 13
    inputs3 = jax.random.normal(k_in2, (B, C, H3, W3), dtype=jnp.float32)
    target3 = jax.random.randint(k_tg2, (B, H3, W3), 0, C, dtype=jnp.int32)
    loss3 = jax.block_until_ready(
        dice_loss(inputs3, target3, n_classes=C, softmax=True))
    ref3 = _dice_loss_ref(inputs3, target3, n_classes=C, softmax=True)
    assert jnp.allclose(loss3, ref3, rtol=1e-5, atol=1e-5), (loss3, ref3)

    print("KERNEL_OK")
</pallas_src>

<mosaic_0001>
module attributes {stable_mosaic.version = 11 : i64} {
  func.func @_dice_sums_kernel(%arg0: i32, %arg1: i32, %arg2: memref<2x4x128xf32, #tpu.memory_space<vmem>>, %arg3: memref<2x128xi8, #tpu.memory_space<vmem>>, %arg4: memref<1x4x128xf32, #tpu.memory_space<vmem>>, %arg5: memref<1x4x128xf32, #tpu.memory_space<vmem>>, %arg6: memref<1x4x128xf32, #tpu.memory_space<vmem>>) attributes {dimension_semantics = [#tpu.dimension_semantics<parallel>, #tpu.dimension_semantics<arbitrary>], iteration_bounds = array<i64: 2, 1>, scalar_prefetch = 0 : i64, scratch_operands = 0 : i64, tpu.core_type = #tpu.core_type<tc>, window_params = [{transform_indices = @transform_0, window_bounds = array<i64: 2, 4, 128>}, {transform_indices = @transform_1, window_bounds = array<i64: 2, 128>}, {transform_indices = @transform_2, window_bounds = array<i64: 1, 4, 128>}, {transform_indices = @transform_3, window_bounds = array<i64: 1, 4, 128>}, {transform_indices = @transform_4, window_bounds = array<i64: 1, 4, 128>}]} {
    %c0_i32 = arith.constant 0 : i32
    %0 = arith.cmpi eq, %arg1, %c0_i32 : i32
    %1 = arith.extui %0 : i1 to i32
    %c0_i32_0 = arith.constant 0 : i32
    %2 = arith.cmpi ne, %1, %c0_i32_0 : i32
    scf.if %2 {
      %cst_30 = arith.constant 0.000000e+00 : f32
      %40 = vector.broadcast %cst_30 : f32 to vector<1x4x128xf32>
      %c0_31 = arith.constant 0 : index
      %c0_32 = arith.constant 0 : index
      %c0_33 = arith.constant 0 : index
      %41 = vector.load %arg4[%c0_31, %c0_32, %c0_33] : memref<1x4x128xf32, #tpu.memory_space<vmem>>, vector<1x4x128xf32>
      tpu.vector_store %arg4[%c0_31, %c0_32, %c0_33], %40 {strides = array<i32>} : memref<1x4x128xf32, #tpu.memory_space<vmem>>, vector<1x4x128xf32>,
      %cst_34 = arith.constant 0.000000e+00 : f32
      %42 = vector.broadcast %cst_34 : f32 to vector<1x4x128xf32>
      %c0_35 = arith.constant 0 : index
      %c0_36 = arith.constant 0 : index
      %c0_37 = arith.constant 0 : index
      %43 = vector.load %arg5[%c0_35, %c0_36, %c0_37] : memref<1x4x128xf32, #tpu.memory_space<vmem>>, vector<1x4x128xf32>
      tpu.vector_store %arg5[%c0_35, %c0_36, %c0_37], %42 {strides = array<i32>} : memref<1x4x128xf32, #tpu.memory_space<vmem>>, vector<1x4x128xf32>,
      %cst_38 = arith.constant 0.000000e+00 : f32
      %44 = vector.broadcast %cst_38 : f32 to vector<1x4x128xf32>
      %c0_39 = arith.constant 0 : index
      %c0_40 = arith.constant 0 : index
      %c0_41 = arith.constant 0 : index
      %45 = vector.load %arg6[%c0_39, %c0_40, %c0_41] : memref<1x4x128xf32, #tpu.memory_space<vmem>>, vector<1x4x128xf32>
      tpu.vector_store %arg6[%c0_39, %c0_40, %c0_41], %44 {strides = array<i32>} : memref<1x4x128xf32, #tpu.memory_space<vmem>>, vector<1x4x128xf32>,
    } else {
    }
    %c0 = arith.constant 0 : index
    %c0_1 = arith.constant 0 : index
    %c0_2 = arith.constant 0 : index
    %3 = vector.load %arg2[%c0, %c0_1, %c0_2] : memref<2x4x128xf32, #tpu.memory_space<vmem>>, vector<2x4x128xf32>
    %cst = arith.constant dense<0xFF800000> : vector<2x128xf32>
    %4 = vector.multi_reduction <maximumf>, %3, %cst [1] : vector<2x4x128xf32> to vector<2x128xf32>
    %5 = vector.shape_cast %4 : vector<2x128xf32> to vector<2x1x128xf32>
    %6 = vector.broadcast %5 : vector<2x1x128xf32> to vector<2x4x128xf32>
    %7 = arith.subf %3, %6 : vector<2x4x128xf32>
    %8 = math.exp %7 : vector<2x4x128xf32>
    %cst_3 = arith.constant dense<0.000000e+00> : vector<2x128xf32>
    %9 = vector.multi_reduction <add>, %8, %cst_3 [1] : vector<2x4x128xf32> to vector<2x128xf32>
    %10 = vector.shape_cast %9 : vector<2x128xf32> to vector<2x1x128xf32>
    %11 = vector.broadcast %10 : vector<2x1x128xf32> to vector<2x4x128xf32>
    %12 = arith.divf %8, %11 : vector<2x4x128xf32>
    %c0_4 = arith.constant 0 : index
    %c0_5 = arith.constant 0 : index
    %13 = vector.load %arg3[%c0_4, %c0_5] : memref<2x128xi8, #tpu.memory_space<vmem>>, vector<2x128xi8>
    %14 = arith.extsi %13 : vector<2x128xi8> to vector<2x128xi32>
    %15 = tpu.iota {dimensions = array<i32: 1>} : vector<2x4x128xi32>
    %16 = vector.shape_cast %14 : vector<2x128xi32> to vector<2x1x128xi32>
    %17 = vector.broadcast %16 : vector<2x1x128xi32> to vector<2x4x128xi32>
    %18 = arith.cmpi eq, %17, %15 : vector<2x4x128xi32>
    %cst_6 = arith.constant 0.000000e+00 : f32
    %19 = vector.broadcast %cst_6 : f32 to vector<2x4x128xf32>
    %20 = arith.select %18, %12, %19 : vector<2x4x128xi1>, vector<2x4x128xf32>
    %cst_7 = arith.constant 1.000000e+00 : f32
    %cst_8 = arith.constant 0.000000e+00 : f32
    %21 = vector.broadcast %cst_7 : f32 to vector<2x4x128xf32>
    %22 = vector.broadcast %cst_8 : f32 to vector<2x4x128xf32>
    %23 = arith.select %18, %21, %22 : vector<2x4x128xi1>, vector<2x4x128xf32>
    %24 = arith.mulf %12, %12 : vector<2x4x128xf32>
    %cst_9 = arith.constant dense<0.000000e+00> : vector<4x128xf32>
    %25 = vector.multi_reduction <add>, %20, %cst_9 [0] : vector<2x4x128xf32> to vector<4x128xf32>
    %26 = vector.shape_cast %25 : vector<4x128xf32> to vector<1x4x128xf32>
    %cst_10 = arith.constant dense<0.000000e+00> : vector<4x128xf32>
    %27 = vector.multi_reduction <add>, %23, %cst_10 [0] : vector<2x4x128xf32> to vector<4x128xf32>
    %28 = vector.shape_cast %27 : vector<4x128xf32> to vector<1x4x128xf32>
    %cst_11 = arith.constant dense<0.000000e+00> : vector<4x128xf32>
    %29 = vector.multi_reduction <add>, %24, %cst_11 [0] : vector<2x4x128xf32> to vector<4x128xf32>
    %30 = vector.shape_cast %29 : vector<4x128xf32> to vector<1x4x128xf32>
    %c0_12 = arith.constant 0 : index
    %c0_13 = arith.constant 0 : index
    %c0_14 = arith.constant 0 : index
    %31 = vector.load %arg4[%c0_12, %c0_13, %c0_14] : memref<1x4x128xf32, #tpu.memory_space<vmem>>, vector<1x4x128xf32>
    %32 = arith.addf %31, %26 : vector<1x4x128xf32>
    %c0_15 = arith.constant 0 : index
    %c0_16 = arith.constant 0 : index
    %c0_17 = arith.constant 0 : index
    %33 = vector.load %arg4[%c0_15, %c0_16, %c0_17] : memref<1x4x128xf32, #tpu.memory_space<vmem>>, vector<1x4x128xf32>
    tpu.vector_store %arg4[%c0_15, %c0_16, %c0_17], %32 {strides = array<i32>} : memref<1x4x128xf32, #tpu.memory_space<vmem>>, vector<1x4x128xf32>,
    %c0_18 = arith.constant 0 : index
    %c0_19 = arith.constant 0 : index
    %c0_20 = arith.constant 0 : index
    %34 = vector.load %arg5[%c0_18, %c0_19, %c0_20] : memref<1x4x128xf32, #tpu.memory_space<vmem>>, vector<1x4x128xf32>
    %35 = arith.addf %34, %30 : vector<1x4x128xf32>
    %c0_21 = arith.constant 0 : index
    %c0_22 = arith.constant 0 : index
    %c0_23 = arith.constant 0 : index
    %36 = vector.load %arg5[%c0_21, %c0_22, %c0_23] : memref<1x4x128xf32, #tpu.memory_space<vmem>>, vector<1x4x128xf32>
    tpu.vector_store %arg5[%c0_21, %c0_22, %c0_23], %35 {strides = array<i32>} : memref<1x4x128xf32, #tpu.memory_space<vmem>>, vector<1x4x128xf32>,
    %c0_24 = arith.constant 0 : index
    %c0_25 = arith.constant 0 : index
    %c0_26 = arith.constant 0 : index
    %37 = vector.load %arg6[%c0_24, %c0_25, %c0_26] : memref<1x4x128xf32, #tpu.memory_space<vmem>>, vector<1x4x128xf32>
    %38 = arith.addf %37, %28 : vector<1x4x128xf32>
    %c0_27 = arith.constant 0 : index
    %c0_28 = arith.constant 0 : index
    %c0_29 = arith.constant 0 : index
    %39 = vector.load %arg6[%c0_27, %c0_28, %c0_29] : memref<1x4x128xf32, #tpu.memory_space<vmem>>, vector<1x4x128xf32>
    tpu.vector_store %arg6[%c0_27, %c0_28, %c0_29], %38 {strides = array<i32>} : memref<1x4x128xf32, #tpu.memory_space<vmem>>, vector<1x4x128xf32>,
    return
  }
  func.func @transform_0(%arg0: i32, %arg1: i32) -> (i32, i32, i32) {
    %c1_i32 = arith.constant 1 : i32
    %0 = arith.muli %arg0, %c1_i32 : i32
    %1 = arith.addi %0, %arg1 : i32
    %c0_i32 = arith.constant 0 : i32
    %c0_i32_0 = arith.constant 0 : i32
    %c0_i32_1 = arith.constant 0 : i32
    return %c0_i32, %c0_i32_0, %1 : i32, i32, i32
  }
  func.func @transform_1(%arg0: i32, %arg1: i32) -> (i32, i32) {
    %c1_i32 = arith.constant 1 : i32
    %0 = arith.muli %arg0, %c1_i32 : i32
    %1 = arith.addi %0, %arg1 : i32
    %c0_i32 = arith.constant 0 : i32
    %c0_i32_0 = arith.constant 0 : i32
    return %c0_i32, %1 : i32, i32
  }
  func.func @transform_2(%arg0: i32, %arg1: i32) -> (i32, i32, i32) {
    %c0_i32 = arith.constant 0 : i32
    %c0_i32_0 = arith.constant 0 : i32
    %c0_i32_1 = arith.constant 0 : i32
    return %arg0, %c0_i32, %c0_i32_0 : i32, i32, i32
  }
  func.func @transform_3(%arg0: i32, %arg1: i32) -> (i32, i32, i32) {
    %c0_i32 = arith.constant 0 : i32
    %c0_i32_0 = arith.constant 0 : i32
    %c0_i32_1 = arith.constant 0 : i32
    return %arg0, %c0_i32, %c0_i32_0 : i32, i32, i32
  }
  func.func @transform_4(%arg0: i32, %arg1: i32) -> (i32, i32, i32) {
    %c0_i32 = arith.constant 0 : i32
    %c0_i32_0 = arith.constant 0 : i32
    %c0_i32_1 = arith.constant 0 : i32
    return %arg0, %c0_i32, %c0_i32_0 : i32, i32, i32
  }
}

</mosaic_0001>

<llo_original>
// kernel: tpu_custom_call.1
$region0: #{tpu_custom_call.1}
  #allocation0 [shape = 'u32[]', space=smem, size = 0x4, offset = 0x4, fixed_abs, tag = 'smem constant byte address 0x4 - core index']
  #allocation1 [shape = 'u32[144,128]{1,0:T(1,128)}', space=vmem, size = 0x12000, scoped, tag = 'internal scratch']
  %s0 = inlined_call_operand.hbm [shape: f32[2,4,256], index: 0, kind: input, shape index: {}]
  %s1 = inlined_call_operand.vmem [shape: s8[2,256], index: 1, kind: input, shape index: {}]
  %s2 = inlined_call_operand.hbm [shape: f32[2,4,128], index: 2, kind: output, shape index: {0}]
  %s3 = inlined_call_operand.hbm [shape: f32[2,4,128], index: 3, kind: output, shape index: {1}]
  %s4 = inlined_call_operand.hbm [shape: f32[2,4,128], index: 4, kind: output, shape index: {2}]
  %5 = xla_tuple %s2, %s3, %s4
  %s6 = sld [smem:[#allocation0]]
  $region65: #{tpu_custom_call.1} parent=0
    _
  %s8 = ssub.s32 1, %s6
  %s9 = scalar_select 0, %s8, %s6
  $region1: #{tpu_custom_call.1} parent=0
    #allocation2 [shape = 'u8[8192]{0}', space=vmem, size = 0x2000, scoped, tag = 'input window, operand 0']
    #allocation3 [shape = 's32[2]{0}', space=sflag, size = 0x8, scoped, tag = 'scoped memory for tpu_custom_call.1']
    #allocation4 [shape = 's32[2]{0}', space=sflag, size = 0x8, scoped, tag = 'scoped memory for tpu_custom_call.1']
    #allocation5 [shape = 'u8[4096]{0}', space=vmem, size = 0x1000, scoped, tag = 'output window, operand 0']
    #allocation6 [shape = 'u8[4096]{0}', space=vmem, size = 0x1000, scoped, tag = 'output window, operand 1']
    #allocation7 [shape = 's32[2]{0}', space=sflag, size = 0x8, scoped, tag = 'scoped memory for tpu_custom_call.1']
    #allocation8 [shape = 'u8[4096]{0}', space=vmem, size = 0x1000, scoped, tag = 'output window, operand 2']
    %10 = vsyncpa [#allocation3], 0
    %s11 = scalar_lea.sflag [#allocation3], 1
    %12 = vsyncpa %s11, 0
    %13 = vsyncpa [#allocation4], 0
    %s14 = scalar_lea.sflag [#allocation4], 1
    %15 = vsyncpa %s14, 0
    %16 = vsyncpa [#allocation7], 0
    %s17 = scalar_lea.sflag [#allocation7], 1
    %18 = vsyncpa %s17, 0
    loop: start=0, step=1, limit=4
    $region2: #{tpu_custom_call.1} parent=1 // loop_pre_header
      _
    $region3: #{tpu_custom_call.1} parent=1 // loop_header
      %s20 = sphi 0, %s24
      %p21 = scmp.ge.s32.totalorder %s20, 4
      %s27 = sphi 0, %s39
      %s28 = sphi 0, %s35
      %s29 = sphi 0, %s27
      %s30 = sphi 0, %s28
      %s31 = sphi 0, %s29
      %s32 = sphi 0, %s30
      %s44 = sphi 0, %s46
      %s47 = sphi 0, %s44
      %s48 = sphi 0, %s47
      %s64 = sphi 0, %s48
      %s72 = sphi 0, %s74
      %s75 = sphi 0, %s72
      %s76 = sphi 0, %s75
      %s92 = sphi 0, %s76
      %s98 = sphi 0, %s100
      %s101 = sphi 0, %s98
      %s102 = sphi 0, %s101
      %s118 = sphi 0, %s102
      %s124 = sphi 0, %s126
      %s127 = sphi 0, %s124
      %s128 = sphi 0, %s127
      %s144 = sphi 0, %s128
      %s150 = sphi 0, %s152
      %s153 = sphi 0, %s150
      %s154 = sphi 0, %s153
      %s170 = sphi 0, %s154
    $region4: #{tpu_custom_call.1} parent=1 // loop_header_branch
      %23 = sbr.rel (%p21) target = $region8
    $region5: #{tpu_custom_call.1} parent=1 // loop_body
      %s25 = ssub.s32 %s20, 1
      %s26 = ssub.s32 %s20, 2
      %s33 = sadd.s32 1, %s28
      %p34 = scmp.ge.s32.totalorder %s33, 1
      %s35 = scalar_select %p34, 0, %s33
      %s36 = sadd.s32 1, %s27
      %s37 = scalar_select %p34, %s36, %s27
      %p38 = scmp.ge.s32.totalorder %s37, 2
      %s39 = scalar_select %p38, 0, %s37
      %s40 = sadd.s32 %s27, %s28
      %s41 = sadd.s32 %s39, %s35
      %s42 = ssub.s32 %s40, %s41
      %p43 = scmp.eq.s32.totalorder %s42, 0
      %s45 = sadd.s32 %s44, 1
      %s46 = scalar_select %p43, %s44, %s45
      %p49 = pneg %p43
      %p50 = scmp.eq.s32.totalorder %s20, 1
      %p51 = por %p49, %p50
      %p52 = scmp.ne.s32.totalorder %s44, %s47
      %p53 = scmp.eq.s32.totalorder %s20, 0
      %p54 = por %p52, %p53
      %p55 = scmp.ne.s32.totalorder %s44, %s47
      %p56 = scmp.eq.s32.totalorder %s25, 1
      %p57 = por %p55, %p56
      %p58 = scmp.ne.s32.totalorder %s47, %s48
      %p59 = scmp.eq.s32.totalorder %s25, 0
      %p60 = por %p58, %p59
      %p61 = scmp.ne.s32.totalorder %s47, %s48
      %p62 = scmp.eq.s32.totalorder %s26, 1
      %p63 = por %p61, %p62
      %p65 = scmp.ne.s32.totalorder %s48, %s64
      %p66 = scmp.eq.s32.totalorder %s26, 0
      %p67 = por %p65, %p66
      %s68 = sadd.s32 %s27, %s28
      %s69 = sadd.s32 %s39, %s35
      %s70 = ssub.s32 %s68, %s69
      %p71 = scmp.eq.s32.totalorder %s70, 0
      %s73 = sadd.s32 %s72, 1
      %s74 = scalar_select %p71, %s72, %s73
      %p77 = pneg %p71
      %p78 = scmp.eq.s32.totalorder %s20, 1
      %p79 = por %p77, %p78
      %p80 = scmp.ne.s32.totalorder %s72, %s75
      %p81 = scmp.eq.s32.totalorder %s20, 0
      %p82 = por %p80, %p81
      %p83 = scmp.ne.s32.totalorder %s72, %s75
      %p84 = scmp.eq.s32.totalorder %s25, 1
      %p85 = por %p83, %p84
      %p86 = scmp.ne.s32.totalorder %s75, %s76
      %p87 = scmp.eq.s32.totalorder %s25, 0
      %p88 = por %p86, %p87
      %p89 = scmp.ne.s32.totalorder %s75, %s76
      %p90 = scmp.eq.s32.totalorder %s26, 1
      %p91 = por %p89, %p90
      %p93 = scmp.ne.s32.totalorder %s76, %s92
      %p94 = scmp.eq.s32.totalorder %s26, 0
      %p95 = por %p93, %p94
      %s96 = ssub.s32 %s27, %s39
      %p97 = scmp.eq.s32.totalorder %s96, 0
      %s99 = sadd.s32 %s98, 1
      %s100 = scalar_select %p97, %s98, %s99
      %p103 = pneg %p97
      %p104 = scmp.eq.s32.totalorder %s20, 1
      %p105 = por %p103, %p104
      %p106 = scmp.ne.s32.totalorder %s98, %s101
      %p107 = scmp.eq.s32.totalorder %s20, 0
      %p108 = por %p106, %p107
      %p109 = scmp.ne.s32.totalorder %s98, %s101
      %p110 = scmp.eq.s32.totalorder %s25, 1
      %p111 = por %p109, %p110
      %p112 = scmp.ne.s32.totalorder %s101, %s102
      %p113 = scmp.eq.s32.totalorder %s25, 0
      %p114 = por %p112, %p113
      %p115 = scmp.ne.s32.totalorder %s101, %s102
      %p116 = scmp.eq.s32.totalorder %s26, 1
      %p117 = por %p115, %p116
      %p119 = scmp.ne.s32.totalorder %s102, %s118
      %p120 = scmp.eq.s32.totalorder %s26, 0
      %p121 = por %p119, %p120
      %s122 = ssub.s32 %s27, %s39
      %p123 = scmp.eq.s32.totalorder %s122, 0
      %s125 = sadd.s32 %s124, 1
      %s126 = scalar_select %p123, %s124, %s125
      %p129 = pneg %p123
      %p130 = scmp.eq.s32.totalorder %s20, 1
      %p131 = por %p129, %p130
      %p132 = scmp.ne.s32.totalorder %s124, %s127
      %p133 = scmp.eq.s32.totalorder %s20, 0
      %p134 = por %p132, %p133
      %p135 = scmp.ne.s32.totalorder %s124, %s127
      %p136 = scmp.eq.s32.totalorder %s25, 1
      %p137 = por %p135, %p136
      %p138 = scmp.ne.s32.totalorder %s127, %s128
      %p139 = scmp.eq.s32.totalorder %s25, 0
      %p140 = por %p138, %p139
      %p141 = scmp.ne.s32.totalorder %s127, %s128
      %p142 = scmp.eq.s32.totalorder %s26, 1
      %p143 = por %p141, %p142
      %p145 = scmp.ne.s32.totalorder %s128, %s144
      %p146 = scmp.eq.s32.totalorder %s26, 0
      %p147 = por %p145, %p146
      %s148 = ssub.s32 %s27, %s39
      %p149 = scmp.eq.s32.totalorder %s148, 0
      %s151 = sadd.s32 %s150, 1
      %s152 = scalar_select %p149, %s150, %s151
      %p155 = pneg %p149
      %p156 = scmp.eq.s32.totalorder %s20, 1
      %p157 = por %p155, %p156
      %p158 = scmp.ne.s32.totalorder %s150, %s153
      %p159 = scmp.eq.s32.totalorder %s20, 0
      %p160 = por %p158, %p159
      %p161 = scmp.ne.s32.totalorder %s150, %s153
      %p162 = scmp.eq.s32.totalorder %s25, 1
      %p163 = por %p161, %p162
      %p164 = scmp.ne.s32.totalorder %s153, %s154
      %p165 = scmp.eq.s32.totalorder %s25, 0
      %p166 = por %p164, %p165
      %p167 = scmp.ne.s32.totalorder %s153, %s154
      %p168 = scmp.eq.s32.totalorder %s26, 1
      %p169 = por %p167, %p168
      %p171 = scmp.ne.s32.totalorder %s154, %s170
      %p172 = scmp.eq.s32.totalorder %s26, 0
      %p173 = por %p171, %p172
      %p174 = scmp.le.s32.totalorder 1, %s20
      %p175 = scmp.lt.s32.totalorder %s20, 3
      %p176 = pnand %p174, %p175
      %p177 = pneg %p176
      // Predicated region
      $region9: #{tpu_custom_call.1} parent=5 // pred_check
        _
      $region10: #{tpu_custom_call.1} parent=5 // pred_check_branch
        %179 = sbr.rel (%p176) target = $region12
      $region11: #{tpu_custom_call.1} parent=5 // pred_region
        %s180 = ssub.s32 %s20, 1
      $region12: #{tpu_custom_call.1} parent=5 // pred_fallthru
        _
      %p181 = scmp.lt.s32.totalorder %s20, 2
      // Predicated region
      $region13: #{tpu_custom_call.1} parent=5 // pred_check
        %p182 = pneg %p181
      $region14: #{tpu_custom_call.1} parent=5 // pred_check_branch
        %184 = sbr.rel (%p182) target = $region16
      $region15: #{tpu_custom_call.1} parent=5 // pred_region
        // Predicated region
        $region17: #{tpu_custom_call.1} parent=15 // pred_check
          %p185 = pneg %p54
        $region18: #{tpu_custom_call.1} parent=15 // pred_check_branch
          %187 = sbr.rel (%p185) target = $region20
        $region19: #{tpu_custom_call.1} parent=15 // pred_region
          %s188 = sand.u32 %s44, 1
          %s189 = scalar_lea.sflag [#allocation3], %s188
          %s190 = sand.u32 %s44, 1
          %s191 = smul.addr %s190, 8
          %s192 = scalar_lea.vmem [#allocation2], %s191
          %s193 = sadd.s32 %s27, %s28
          %s195 = ssub.s32 128, 128
          %196 = vsyncadd %s189, %s195
          %s197 = smul.addr %s193, 64
          %s198 = scalar_lea.hbm %s0, %s197
          %s199 = sshll.u32 %s192, 4
          %s200 = int_to_ptr.vmem [resolvable:$true] %s199
          %205 = dma.hbm_to_vmem [thread:$0]  %s198, 128, %s200, %s189, 128, 64, 4
        $region20: #{tpu_custom_call.1} parent=15 // pred_fallthru
          _
        // Predicated region
        $region21: #{tpu_custom_call.1} parent=15 // pred_check
          %p206 = pneg %p82
        $region22: #{tpu_custom_call.1} parent=15 // pred_check_branch
          %208 = sbr.rel (%p206) target = $region24
        $region23: #{tpu_custom_call.1} parent=15 // pred_region
          %s209 = sadd.s32 %s27, %s28
          %p210 = scmp.lt.s32.totalorder %s209, 1
          %s211 = scalar_select %p210, %s209, 1
          %s212 = scalar_lea.vmem %s1, %s211
          %s213 = sadd.s32 %s27, %s28
        $region24: #{tpu_custom_call.1} parent=15 // pred_fallthru
          _
      $region16: #{tpu_custom_call.1} parent=5 // pred_fallthru
        _
      %p214 = scmp.le.s32.totalorder 1, %s20
      %p215 = scmp.lt.s32.totalorder %s20, 3
      %p216 = pnand %p214, %p215
      %p217 = pneg %p216
      // Predicated region
      $region25: #{tpu_custom_call.1} parent=5 // pred_check
        _
      $region26: #{tpu_custom_call.1} parent=5 // pred_check_branch
        %219 = sbr.rel (%p216) target = $region28
      $region27: #{tpu_custom_call.1} parent=5 // pred_region
        %s220 = ssub.s32 %s20, 1
        %s221 = sand.u32 %s47, 1
        %s222 = scalar_lea.sflag [#allocation3], %s221
        %s223 = sand.u32 %s47, 1
        %s224 = smul.addr %s223, 8
        %s225 = scalar_lea.vmem [#allocation2], %s224
        // Predicated region
        $region29: #{tpu_custom_call.1} parent=27 // pred_check
          %p226 = pneg %p60
        $region30: #{tpu_custom_call.1} parent=27 // pred_check_branch
          %228 = sbr.rel (%p226) target = $region32
        $region31: #{tpu_custom_call.1} parent=27 // pred_region
          %229 = dma.done %s222, 128
        $region32: #{tpu_custom_call.1} parent=27 // pred_fallthru
          _
        %s230 = sand.u32 %s47, 1
        %s231 = scalar_lea.sflag [#allocation3], %s230
        %s232 = sand.u32 %s47, 1
        %s233 = smul.addr %s232, 8
        %s234 = scalar_lea.vmem [#allocation2], %s233
        %p235 = pneg %p60
        %p236 = pneg %p57
        %s237 = sadd.s32 %s29, %s30
        %p238 = scmp.lt.s32.totalorder %s237, 1
        %s239 = scalar_select %p238, %s237, 1
        %s240 = scalar_lea.vmem %s1, %s239
        %p241 = pneg %p88
        %p242 = pneg %p85
        %p243 = pneg %p114
        %p244 = pneg %p111
        %s245 = sand.u32 %s101, 1
        %s246 = scalar_lea.sflag [#allocation4], %s245
        %s247 = sand.u32 %s101, 1
        %s248 = smul.addr %s247, 4
        %s249 = scalar_lea.vmem [#allocation5], %s248
        %p250 = pneg %p140
        %p251 = pneg %p137
        %s252 = sand.u32 %s25, 1
        %s253 = scalar_lea.sflag [#allocation7], %s252
        %s254 = sand.u32 %s127, 1
        %s255 = smul.addr %s254, 4
        %s256 = scalar_lea.vmem [#allocation6], %s255
        %p257 = pneg %p166
        %p258 = pneg %p163
        %s259 = sand.u32 %s25, 1
        %s260 = scalar_lea.sflag [#allocation7], %s259
        %s261 = sand.u32 %s153, 1
        %s262 = smul.addr %s261, 4
        %s263 = scalar_lea.vmem [#allocation8], %s262
        %s264 = sadd.s32 %s29, %s30
        %s265 = sadd.s32 %s29, %s30
        %p266 = scmp.lt.s32.totalorder %s265, 1
        %s267 = scalar_select %p266, %s265, 1
        %s268 = scalar_lea.vmem %s1, %s267
        %s269 = sadd.s32 %s29, %s30
        %p270 = scmp.eq.s32.totalorder %s30, 0
        // Predicated region
        $region33: #{tpu_custom_call.1} parent=27 // pred_check
          %p271 = pneg %p270
        $region34: #{tpu_custom_call.1} parent=27 // pred_check_branch
          %273 = sbr.rel (%p271) target = $region36
        $region35: #{tpu_custom_call.1} parent=27 // pred_region
          %274 = vst [vmem:[%s249] sm:$0xf] 0.0
          %275 = vst [vmem:[%s256] sm:$0xf] 0.0
          %276 = vst [vmem:[%s263] sm:$0xf] 0.0
        $region36: #{tpu_custom_call.1} parent=27 // pred_fallthru
          _
        %v277 = vld [vmem:[%s225] sm:$0xf]
        %v278 = vld [vmem:[%s225 + $0x4] sm:$0xf]
        %vm279 = vcmask 1043456
        %v280 = vsel %vm279, %v277, -inf
        %v281 = vrot.slane %v280, 4
        %v282 = vmax.f32 %v280, %v281
        %v283 = vrot.slane %v282, 2
        %v284 = vmax.f32 %v282, %v283
        %v285 = vrot.slane %v284, 1
        %v286 = vmax.f32 %v284, %v285
        %v287 = vsel %vm279, %v278, -inf
        %v288 = vrot.slane %v287, 4
        %v289 = vmax.f32 %v287, %v288
        %v290 = vrot.slane %v289, 2
        %v291 = vmax.f32 %v289, %v290
        %v292 = vrot.slane %v291, 1
        %v293 = vmax.f32 %v291, %v292
        %v294 = vsub.f32 %v277, %v286
        %v295 = vsub.f32 %v278, %v293
        %v296 = vmul.f32 %v294, 1.442695
        %v297 = vpow.pop %v296
        %v298 = vmul.f32 %v295, 1.442695
        %v299 = vpow.pop %v298
        %v300 = vsel %vm279, %v297, 0.0
        %v301 = vrot.slane %v300, 4
        %v302 = vadd.f32 %v300, %v301
        %v303 = vrot.slane %v302, 2
        %v304 = vadd.f32 %v302, %v303
        %v305 = vrot.slane %v304, 1
        %v306 = vadd.f32 %v304, %v305
        %v307 = vsel %vm279, %v299, 0.0
        %v308 = vrot.slane %v307, 4
        %v309 = vadd.f32 %v307, %v308
        %v310 = vrot.slane %v309, 2
        %v311 = vadd.f32 %v309, %v310
        %v312 = vrot.slane %v311, 1
        %v313 = vadd.f32 %v311, %v312
        %v314 = vrcp.pop %v306
        %v315 = vmul.f32 %v297, %v314
        %v316 = vrcp.pop %v313
        %v317 = vmul.f32 %v299, %v316
        %v318 = vld [vmem:[%s268] sm:$0x1]
        %v319 = vunpack.c.0.s8 %v318
        %v320 = vlaneseq
        %v321 = vshrl.u32 %v320, 7
        %v323 = vunpack.c.l.s4 1966171168
        %v324 = vunpack.c.0.s8 %v323
        %v325 = vlaneseq
        %v326 = vshrl.u32 %v325, 7
        %v327 = vsub.s32 %v324, %v326
        %v328 = vrot.slane %v319, %v327
        %v329 = vcombine.high %v328, %v328
        %v331 = vunpack.c.l.s4 1966171168
        %v332 = vunpack.c.0.s8 %v331
        %v333 = vlaneseq
        %v334 = vshrl.u32 %v333, 7
        %v335 = vsub.s32 %v332, %v334
        %v336 = vrot.slane %v328, %v335
        %v338 = vunpack.c.l.s4 1966171168
        %v339 = vunpack.c.0.s8 %v338
        %v340 = vlaneseq
        %v341 = vshrl.u32 %v340, 7
        %v342 = vsub.s32 %v339, %v341
        %v343 = vrot.slane %v329, %v342
        %v344 = vlaneseq
        %v345 = vshrl.u32 %v344, 7
        %v346 = vsub.s32 0, %v345
        %v347 = vrot.slane %v336, %v346
        %v348 = vlaneseq
        %v349 = vshrl.u32 %v348, 7
        %v350 = vsub.s32 0, %v349
        %v351 = vrot.slane %v343, %v350
        %vm352 = vcmp.eq.s32.totalorder %v347, %v321
        %vm353 = vcmp.eq.s32.totalorder %v351, %v321
        %v354 = vsel %vm352, %v315, 0.0
        %v355 = vsel %vm353, %v317, 0.0
        %v356 = vsel %vm352, 1.0, 0.0
        %v357 = vsel %vm353, 1.0, 0.0
        %v358 = vmul.f32 %v315, %v315
        %v359 = vmul.f32 %v317, %v317
        %v360 = vsel %vm279, %v354, 0.0
        %v361 = vsel %vm279, %v355, 0.0
        %v362 = vadd.f32 %v360, %v361
        %v363 = vsel %vm279, %v356, 0.0
        %v364 = vsel %vm279, %v357, 0.0
        %v365 = vadd.f32 %v363, %v364
        %v366 = vsel %vm279, %v358, 0.0
        %v367 = vsel %vm279, %v359, 0.0
        %v368 = vadd.f32 %v366, %v367
        %v369 = vld [vmem:[%s249] sm:$0xf]
        %v370 = vadd.f32 %v369, %v362
        %371 = vst [vmem:[%s249] sm:$0xf] %v370
        %v372 = vld [vmem:[%s256] sm:$0xf]
        %v373 = vadd.f32 %v372, %v368
        %374 = vst [vmem:[%s256] sm:$0xf] %v373
        %v375 = vld [vmem:[%s263] sm:$0xf]
        %v376 = vadd.f32 %v375, %v365
        %377 = vst [vmem:[%s263] sm:$0xf] %v376
        %s378 = sand.u32 %s101, 1
        %s379 = scalar_lea.sflag [#allocation4], %s378
        %s380 = sand.u32 %s101, 1
        %s381 = smul.addr %s380, 4
        %s382 = scalar_lea.vmem [#allocation5], %s381
        %s383 = sand.u32 %s25, 1
        %s384 = scalar_lea.sflag [#allocation7], %s383
        %s385 = sand.u32 %s127, 1
        %s386 = smul.addr %s385, 4
        %s387 = scalar_lea.vmem [#allocation6], %s386
        %s388 = sand.u32 %s25, 1
        %s389 = scalar_lea.sflag [#allocation7], %s388
        %s390 = sand.u32 %s153, 1
        %s391 = smul.addr %s390, 4
        %s392 = scalar_lea.vmem [#allocation8], %s391
        // Predicated region
        $region37: #{tpu_custom_call.1} parent=27 // pred_check
          %p393 = pneg %p111
        $region38: #{tpu_custom_call.1} parent=27 // pred_check_branch
          %395 = sbr.rel (%p393) target = $region40
        $region39: #{tpu_custom_call.1} parent=27 // pred_region
          %s397 = ssub.s32 64, 64
          %398 = vsyncadd %s379, %s397
          %s399 = smul.addr %s29, 64
          %s400 = scalar_lea.hbm %s2, %s399
          %s402 = sshll.u32 %s382, 4
          %s403 = int_to_ptr.vmem [resolvable:$true] %s402
          %405 = dma.vmem_to_hbm [thread:$0]  %s403, 64, %s400, %s379
        $region40: #{tpu_custom_call.1} parent=27 // pred_fallthru
          _
        // Predicated region
        $region41: #{tpu_custom_call.1} parent=27 // pred_check
          %p406 = pneg %p137
        $region42: #{tpu_custom_call.1} parent=27 // pred_check_branch
          %408 = sbr.rel (%p406) target = $region44
        $region43: #{tpu_custom_call.1} parent=27 // pred_region
          %s410 = ssub.s32 64, 64
          %411 = vsyncadd %s384, %s410
          %s412 = smul.addr %s29, 64
          %s413 = scalar_lea.hbm %s3, %s412
          %s415 = sshll.u32 %s387, 4
          %s416 = int_to_ptr.vmem [resolvable:$true] %s415
          %418 = dma.vmem_to_hbm [thread:$0]  %s416, 64, %s413, %s384
        $region44: #{tpu_custom_call.1} parent=27 // pred_fallthru
          _
        // Predicated region
        $region45: #{tpu_custom_call.1} parent=27 // pred_check
          %p419 = pneg %p163
        $region46: #{tpu_custom_call.1} parent=27 // pred_check_branch
          %421 = sbr.rel (%p419) target = $region48
        $region47: #{tpu_custom_call.1} parent=27 // pred_region
          %s423 = ssub.s32 64, 64
          %424 = vsyncadd %s389, %s423
          %s425 = smul.addr %s29, 64
          %s426 = scalar_lea.hbm %s4, %s425
          %s428 = sshll.u32 %s392, 4
          %s429 = int_to_ptr.vmem [resolvable:$true] %s428
          %431 = dma.vmem_to_hbm [thread:$0]  %s429, 64, %s426, %s389
        $region48: #{tpu_custom_call.1} parent=27 // pred_fallthru
          _
      $region28: #{tpu_custom_call.1} parent=5 // pred_fallthru
        _
      %p432 = scmp.le.s32.totalorder 2, %s20
      // Predicated region
      $region49: #{tpu_custom_call.1} parent=5 // pred_check
        %p433 = pneg %p432
      $region50: #{tpu_custom_call.1} parent=5 // pred_check_branch
        %435 = sbr.rel (%p433) target = $region52
      $region51: #{tpu_custom_call.1} parent=5 // pred_region
        %s436 = ssub.s32 %s20, 2
        // Predicated region
        $region53: #{tpu_custom_call.1} parent=51 // pred_check
          %p437 = pneg %p117
        $region54: #{tpu_custom_call.1} parent=51 // pred_check_branch
          %439 = sbr.rel (%p437) target = $region56
        $region55: #{tpu_custom_call.1} parent=51 // pred_region
          %s440 = sand.u32 %s102, 1
          %s441 = scalar_lea.sflag [#allocation4], %s440
          %s442 = sand.u32 %s102, 1
          %s443 = smul.addr %s442, 4
          %s444 = scalar_lea.vmem [#allocation5], %s443
          %445 = dma.done %s441, 64
        $region56: #{tpu_custom_call.1} parent=51 // pred_fallthru
          _
        // Predicated region
        $region57: #{tpu_custom_call.1} parent=51 // pred_check
          %p446 = pneg %p143
        $region58: #{tpu_custom_call.1} parent=51 // pred_check_branch
          %448 = sbr.rel (%p446) target = $region60
        $region59: #{tpu_custom_call.1} parent=51 // pred_region
          %s449 = sand.u32 %s26, 1
          %s450 = scalar_lea.sflag [#allocation7], %s449
          %s451 = sand.u32 %s128, 1
          %s452 = smul.addr %s451, 4
          %s453 = scalar_lea.vmem [#allocation6], %s452
          %454 = dma.done %s450, 64
        $region60: #{tpu_custom_call.1} parent=51 // pred_fallthru
          _
        // Predicated region
        $region61: #{tpu_custom_call.1} parent=51 // pred_check
          %p455 = pneg %p169
        $region62: #{tpu_custom_call.1} parent=51 // pred_check_branch
          %457 = sbr.rel (%p455) target = $region64
        $region63: #{tpu_custom_call.1} parent=51 // pred_region
          %s458 = sand.u32 %s26, 1
          %s459 = scalar_lea.sflag [#allocation7], %s458
          %s460 = sand.u32 %s154, 1
          %s461 = smul.addr %s460, 4
          %s462 = scalar_lea.vmem [#allocation8], %s461
          %463 = dma.done %s459, 64
        $region64: #{tpu_custom_call.1} parent=51 // pred_fallthru
          _
      $region52: #{tpu_custom_call.1} parent=5 // pred_fallthru
        _
    $region6: #{tpu_custom_call.1} parent=1 // loop_footer
      %s24 = sadd.s32 1, %s20
    $region7: #{tpu_custom_call.1} parent=1 // loop_footer_branch
      %19 = sbr.rel target = $region3
    $region8: #{tpu_custom_call.1} parent=1 // loop_exit
      _
    %464 = vsyncpa [#allocation3], 1
    %s465 = scalar_lea.sflag [#allocation3], 1
    %466 = vsyncpa %s465, 1
    %467 = vsyncpa [#allocation4], 1
    %s468 = scalar_lea.sflag [#allocation4], 1
    %469 = vsyncpa %s468, 1
    %470 = vsyncpa [#allocation7], 1
    %s471 = scalar_lea.sflag [#allocation7], 1
    %472 = vsyncpa %s471, 1

</llo_original>
